<compile_context>
chip_gen: v5e
topology: v5e:2x2
jax: 0.10.0
libtpu: 0.0.40
codegen_flags: <defaults>
</compile_context>

<pallas_src>
import jax
import jax.numpy as jnp
from jax.experimental import pallas as pl
from jax.experimental.pallas import tpu as pltpu


def _round_up(v, m):
    return ((v + m - 1) // m) * m


def _make_kernel(h_chunk):
    """Build the fused fc1->ReLU->fc2 kernel body.

    h_chunk: None -> single pass over the full hidden dim.
             int  -> loop over hidden-dim chunks with an f32 accumulator so the
                     f32 intermediate stays small (no VMEM spill for large H).
    """

    def kernel(x_ref, w1_ref, b1_ref, w2_ref, b2_ref, o_ref):
        w_dtype = w1_ref.dtype
        x = x_ref[...]
        if x.dtype != w_dtype:
            # Cast f32 -> bf16 on the VPU; avoids a separate padded bf16 copy
            # of x in HBM (reads 4 B/elem once instead of 4+2+2).
            x = x.astype(w_dtype)

        h_total = w1_ref.shape[1]
        if h_chunk is None or h_chunk >= h_total:
            h = jnp.dot(x, w1_ref[...], preferred_element_type=jnp.float32)
            h = jnp.maximum(h + b1_ref[...], 0.0)           # bias + ReLU in f32
            y = jnp.dot(h.astype(w_dtype), w2_ref[...],
                        preferred_element_type=jnp.float32)
        else:
            y = jnp.zeros((x.shape[0], w2_ref.shape[1]), jnp.float32)
            for h0 in range(0, h_total, h_chunk):           # static unrolled loop
                hs = min(h_chunk, h_total - h0)
                hc = jnp.dot(x, w1_ref[:, h0:h0 + hs],
                             preferred_element_type=jnp.float32)
                hc = jnp.maximum(hc + b1_ref[:, h0:h0 + hs], 0.0)
                y = y + jnp.dot(hc.astype(w_dtype), w2_ref[h0:h0 + hs, :],
                                preferred_element_type=jnp.float32)

        o_ref[...] = (y + b2_ref[...]).astype(o_ref.dtype)

    return kernel


def prepare_params(w1, b1, w2, b2, *, param_dtype=jnp.bfloat16):
    """One-time param prep (do NOT call per forward pass).

    w1: [D_in, H], b1: [H], w2: [H, D_out], b2: [D_out]  (weights already in
    [in, out] layout, i.e. transposed from torch's nn.Linear [out, in]).

    Pads H / D_out up to multiples of 128 only when they are >= 128 (lane-dense
    stores / MXU tiles for real model sizes, no inflation for tiny models), and
    casts weights to `param_dtype` (bf16 by default; pass jnp.float32 for f32
    parity with PyTorch).  The contraction dim D_in is never padded.
    """
    D_in, H = w1.shape
    D_out = w2.shape[1]
    H_p = _round_up(H, 128) if H >= 128 else H
    D_out_p = _round_up(D_out, 128) if D_out >= 128 else D_out

    def pad2(a, rows, cols):
        if a.shape == (rows, cols):
            return a
        return jnp.zeros((rows, cols), a.dtype).at[:a.shape[0], :a.shape[1]].set(a)

    w1p = pad2(w1.astype(param_dtype), D_in, H_p)
    w2p = pad2(w2.astype(param_dtype), H_p, D_out_p)
    b1p = pad2(b1.astype(jnp.float32)[None, :], 1, H_p)
    b2p = pad2(b2.astype(jnp.float32)[None, :], 1, D_out_p)
    return {"w1": w1p, "b1": b1p, "w2": w2p, "b2": b2p, "d_out": D_out}


def feature_decoder(x, params, *, tb=None, out_dtype=None):
    """y = fc2(relu(fc1(x))).  x: [B, D_in]; params from prepare_params()."""
    w1p, b1p, w2p, b2p = params["w1"], params["b1"], params["w2"], params["b2"]
    d_out = params["d_out"]
    B, D_in = x.shape
    assert w1p.shape[0] == D_in, "x feature dim does not match prepared w1"
    H_p = w1p.shape[1]
    D_out_p = w2p.shape[1]
    if out_dtype is None:
        out_dtype = x.dtype  # pass jnp.bfloat16 to halve the output HBM write

    h_chunk = 512 if H_p > 2048 else None
    kernel = _make_kernel(h_chunk)

    # ---- Small-problem fast path: one un-gridded block, no padding at all ----
    if tb is None and B <= 512:
        out = pl.pallas_call(
            kernel,
            out_shape=jax.ShapeDtypeStruct((B, D_out_p), out_dtype),
        )(x, w1p, b1p, w2p, b2p)
        return out[:, :d_out] if d_out != D_out_p else out

    # ---- Batch-gridded path: weights resident, x/out tiles stream ----
    if tb is None:
        tb = 512                      # 256-aligned: full MXU passes on v6e/v7x
    tb = max(8, _round_up(int(tb), 8))
    if tb >= 256:
        tb = _round_up(tb, 256)

    x_isz = jnp.dtype(x.dtype).itemsize
    o_isz = jnp.dtype(out_dtype).itemsize
    w_isz = jnp.dtype(w1p.dtype).itemsize

    def vmem_needed(tb_):
        x_b = 2 * tb_ * D_in * x_isz                      # x double-buffer
        o_b = 2 * tb_ * D_out_p * o_isz                   # out double-buffer
        w_b = (D_in * H_p + H_p * D_out_p) * w_isz        # single-buffered weights
        bias_b = (H_p + D_out_p) * 4
        h_b = tb_ * (h_chunk if h_chunk else H_p) * 4     # f32 intermediate
        return x_b + o_b + w_b + bias_b + h_b

    budget = 56 * 2 ** 20  # stay under v7x's 64 MiB/TC with headroom
    while vmem_needed(tb) > budget and tb > 256:
        tb = max(256, tb // 2)
    # TODO(synk): if the resident weights alone exceed the VMEM budget (very
    # large H / D_out), stream w2 (and/or w1) over an extra grid axis with an
    # f32 accumulator instead of keeping both matrices VMEM-resident.

    B_p = _round_up(B, tb)
    xp = x if B_p == B else jnp.zeros((B_p, D_in), x.dtype).at[:B].set(x)
    grid = (B_p // tb,)

    flops = 2 * B_p * (D_in * H_p + H_p * D_out_p)
    bytes_accessed = (B_p * D_in * x_isz
                      + (D_in * H_p + H_p * D_out_p) * w_isz
                      + (H_p + D_out_p) * 4
                      + B_p * D_out_p * o_isz)
    vmem_limit = int(min(64 * 2 ** 20, max(16 * 2 ** 20, vmem_needed(tb) * 3 // 2)))

    def call(single_buffer_weights):
        if single_buffer_weights:
            # Constant index_map -> DMA'd once; single-buffer to halve weight VMEM.
            def const(shape):
                return pl.BlockSpec(shape, lambda i: (0, 0),
                                    pipeline_mode=pl.Buffered(1))
        else:
            def const(shape):
                return pl.BlockSpec(shape, lambda i: (0, 0))

        return pl.pallas_call(
            kernel,
            out_shape=jax.ShapeDtypeStruct((B_p, D_out_p), out_dtype),
            grid=grid,
            in_specs=[
                pl.BlockSpec((tb, D_in), lambda i: (i, 0)),   # x marches over batch
                const((D_in, H_p)),
                const((1, H_p)),
                const((H_p, D_out_p)),
                const((1, D_out_p)),
            ],
            out_specs=pl.BlockSpec((tb, D_out_p), lambda i: (i, 0)),
            compiler_params=pltpu.CompilerParams(
                dimension_semantics=("parallel",),
                vmem_limit_bytes=vmem_limit),
            cost_estimate=pl.CostEstimate(
                flops=flops, transcendentals=0, bytes_accessed=bytes_accessed),
        )(xp, w1p, b1p, w2p, b2p)

    try:
        out = jax.block_until_ready(call(True))
    except Exception:  # fallback if single-buffered pipeline_mode is rejected
        out = call(False)

    out = out[:B] if B_p != B else out
    return out[:, :d_out] if d_out != D_out_p else out


def init_params(key, input_dim, hidden_dim, output_dim):
    """Deterministic init mimicking nn.Linear default (uniform +/- 1/sqrt(fan_in)).
    Weights returned already transposed to [in, out] for the kernel layout."""
    k1, k2, k3, k4 = jax.random.split(key, 4)
    lim1 = 1.0 / jnp.sqrt(input_dim)
    lim2 = 1.0 / jnp.sqrt(hidden_dim)
    w1 = jax.random.uniform(k1, (input_dim, hidden_dim), jnp.float32, -lim1, lim1)
    b1 = jax.random.uniform(k2, (hidden_dim,), jnp.float32, -lim1, lim1)
    w2 = jax.random.uniform(k3, (hidden_dim, output_dim), jnp.float32, -lim2, lim2)
    b2 = jax.random.uniform(k4, (output_dim,), jnp.float32, -lim2, lim2)
    return w1, b1, w2, b2


def reference(x, w1, b1, w2, b2):
    h = jnp.maximum(x @ w1 + b1, 0.0)
    return h @ w2 + b2


if __name__ == "__main__":
    input_dim, hidden_dim, output_dim = 32, 64, 16
    batch = 40  # not a multiple of the tile -> exercises batch padding

    key = jax.random.PRNGKey(0)
    kx, kp = jax.random.split(key)
    x = jax.random.normal(kx, (batch, input_dim), jnp.float32)
    w1, b1, w2, b2 = init_params(kp, input_dim, hidden_dim, output_dim)

    params = prepare_params(w1, b1, w2, b2)   # one-time pad + bf16 cast
    ref = reference(x, w1, b1, w2, b2)

    # Small/un-gridded fast path (default dispatch for this size).
    out_small = jax.block_until_ready(feature_decoder(x, params))
    # Batch-gridded path (tb=16 -> grid=(3,)), exercising index maps + padding.
    out_grid = jax.block_until_ready(feature_decoder(x, params, tb=16))

    assert out_small.shape == (batch, output_dim)
    assert out_grid.shape == (batch, output_dim)
    # bf16 weights/activations with f32 accumulation -> looser tolerance than f32.
    assert jnp.allclose(out_small, ref, atol=5e-2, rtol=5e-2), (
        float(jnp.max(jnp.abs(out_small - ref))))
    assert jnp.allclose(out_grid, ref, atol=5e-2, rtol=5e-2), (
        float(jnp.max(jnp.abs(out_grid - ref))))

    print("KERNEL_OK")
</pallas_src>

<mosaic_0001>
module attributes {stable_mosaic.version = 11 : i64} {
  func.func @kernel(%arg0: memref<40x32xf32, #tpu.memory_space<vmem>>, %arg1: memref<32x64xbf16, #tpu.memory_space<vmem>>, %arg2: memref<1x64xf32, #tpu.memory_space<vmem>>, %arg3: memref<64x16xbf16, #tpu.memory_space<vmem>>, %arg4: memref<1x16xf32, #tpu.memory_space<vmem>>, %arg5: memref<40x16xf32, #tpu.memory_space<vmem>>) attributes {dimension_semantics = [], scalar_prefetch = 0 : i64, scratch_operands = 0 : i64, tpu.core_type = #tpu.core_type<tc>} {
    %c0 = arith.constant 0 : index
    %c0_0 = arith.constant 0 : index
    %0 = vector.load %arg0[%c0, %c0_0] : memref<40x32xf32, #tpu.memory_space<vmem>>, vector<40x32xf32>
    %1 = arith.truncf %0 : vector<40x32xf32> to vector<40x32xbf16>
    %c0_1 = arith.constant 0 : index
    %c0_2 = arith.constant 0 : index
    %2 = vector.load %arg1[%c0_1, %c0_2] : memref<32x64xbf16, #tpu.memory_space<vmem>>, vector<32x64xbf16>
    %cst = arith.constant dense<0.000000e+00> : vector<40x64xf32>
    %3 = tpu.matmul %1, %2, %cst {dimension_numbers = #tpu.dot_dimension_numbers<[1], [0], [0], [1], [0, 0, 1, 1], [], []>} : vector<40x32xbf16>, vector<32x64xbf16>, vector<40x64xf32> -> vector<40x64xf32>
    %c0_3 = arith.constant 0 : index
    %c0_4 = arith.constant 0 : index
    %4 = vector.load %arg2[%c0_3, %c0_4] : memref<1x64xf32, #tpu.memory_space<vmem>>, vector<1x64xf32>
    %5 = vector.broadcast %4 : vector<1x64xf32> to vector<40x64xf32>
    %6 = arith.addf %3, %5 : vector<40x64xf32>
    %cst_5 = arith.constant 0.000000e+00 : f32
    %7 = vector.broadcast %cst_5 : f32 to vector<40x64xf32>
    %8 = arith.maximumf %6, %7 : vector<40x64xf32>
    %9 = arith.truncf %8 : vector<40x64xf32> to vector<40x64xbf16>
    %c0_6 = arith.constant 0 : index
    %c0_7 = arith.constant 0 : index
    %10 = vector.load %arg3[%c0_6, %c0_7] : memref<64x16xbf16, #tpu.memory_space<vmem>>, vector<64x16xbf16>
    %cst_8 = arith.constant dense<0.000000e+00> : vector<40x16xf32>
    %11 = tpu.matmul %9, %10, %cst_8 {dimension_numbers = #tpu.dot_dimension_numbers<[1], [0], [0], [1], [0, 0, 1, 1], [], []>} : vector<40x64xbf16>, vector<64x16xbf16>, vector<40x16xf32> -> vector<40x16xf32>
    %c0_9 = arith.constant 0 : index
    %c0_10 = arith.constant 0 : index
    %12 = vector.load %arg4[%c0_9, %c0_10] : memref<1x16xf32, #tpu.memory_space<vmem>>, vector<1x16xf32>
    %13 = vector.broadcast %12 : vector<1x16xf32> to vector<40x16xf32>
    %14 = arith.addf %11, %13 : vector<40x16xf32>
    %c0_11 = arith.constant 0 : index
    %c0_12 = arith.constant 0 : index
    %15 = vector.load %arg5[%c0_11, %c0_12] : memref<40x16xf32, #tpu.memory_space<vmem>>, vector<40x16xf32>
    tpu.vector_store %arg5[%c0_11, %c0_12], %14 {strides = array<i32>} : memref<40x16xf32, #tpu.memory_space<vmem>>, vector<40x16xf32>,
    return
  }
}

</mosaic_0001>

<llo_original>
// kernel: tpu_custom_call.1
$region0: #{tpu_custom_call.1}
  #allocation0 [shape = 'u32[]', space=smem, size = 0x4, offset = 0x4, fixed_abs, tag = 'smem constant byte address 0x4 - core index']
  #allocation1 [shape = 'u32[72,128]{1,0:T(1,128)}', space=vmem, size = 0x9000, scoped, tag = 'internal scratch']
  %s0 = inlined_call_operand.vmem [shape: f32[40,32], index: 0, kind: input, shape index: {}]
  %s1 = inlined_call_operand.vmem [shape: bf16[32,64], index: 1, kind: input, shape index: {}]
  %s2 = inlined_call_operand.vmem [shape: f32[1,64], index: 2, kind: input, shape index: {}]
  %s3 = inlined_call_operand.vmem [shape: bf16[64,16], index: 3, kind: input, shape index: {}]
  %s4 = inlined_call_operand.vmem [shape: f32[1,16], index: 4, kind: input, shape index: {}]
  %s5 = inlined_call_operand.vmem [shape: f32[40,16], index: 5, kind: output, shape index: {}]
  %s6 = sld [smem:[#allocation0]]
  $region30: #{tpu_custom_call.1} parent=0
    _
  %s8 = ssub.s32 1, %s6
  %s9 = scalar_select 0, %s8, %s6
  // Predicated region
  $region2: #{tpu_custom_call.1} parent=0 // pred_check
    _
  $region3: #{tpu_custom_call.1} parent=0 // pred_check_branch
    %11 = sbr.rel (0) target = $region5
  $region4: #{tpu_custom_call.1} parent=0 // pred_region
    _
  $region5: #{tpu_custom_call.1} parent=0 // pred_fallthru
    _
  // Predicated region
  $region6: #{tpu_custom_call.1} parent=0 // pred_check
    _
  $region7: #{tpu_custom_call.1} parent=0 // pred_check_branch
    %13 = sbr.rel (0) target = $region9
  $region8: #{tpu_custom_call.1} parent=0 // pred_region
    _
  $region9: #{tpu_custom_call.1} parent=0 // pred_fallthru
    _
  // Predicated region
  $region10: #{tpu_custom_call.1} parent=0 // pred_check
    _
  $region11: #{tpu_custom_call.1} parent=0 // pred_check_branch
    %15 = sbr.rel (0) target = $region13
  $region12: #{tpu_custom_call.1} parent=0 // pred_region
    _
  $region13: #{tpu_custom_call.1} parent=0 // pred_fallthru
    _
  // Predicated region
  $region14: #{tpu_custom_call.1} parent=0 // pred_check
    _
  $region15: #{tpu_custom_call.1} parent=0 // pred_check_branch
    %17 = sbr.rel (0) target = $region17
  $region16: #{tpu_custom_call.1} parent=0 // pred_region
    _
  $region17: #{tpu_custom_call.1} parent=0 // pred_fallthru
    _
  // Predicated region
  $region18: #{tpu_custom_call.1} parent=0 // pred_check
    _
  $region19: #{tpu_custom_call.1} parent=0 // pred_check_branch
    %19 = sbr.rel (0) target = $region21
  $region20: #{tpu_custom_call.1} parent=0 // pred_region
    _
  $region21: #{tpu_custom_call.1} parent=0 // pred_fallthru
    _
  %v21 = vld [vmem:[%s0] sm:$0xff]
  %v22 = vld [vmem:[%s0 + $0x8] sm:$0xff]
  %v23 = vld [vmem:[%s0 + $0x10] sm:$0xff]
  %v24 = vld [vmem:[%s0 + $0x18] sm:$0xff]
  %v25 = vld [vmem:[%s0 + $0x20] sm:$0xff]
  %v26 = vpack.c.bf16 %v22, %v21
  %v27 = vpack.c.bf16 %v24, %v23
  %v28 = vpack.c.bf16 %v25, %v25
  %v29 = vld [vmem:[%s1] sm:$0xf]
  %v30 = vld [vmem:[%s1 + $0x4] sm:$0xf]
  %v31 = vld [vmem:[%s1 + $0x8] sm:$0xf]
  %v32 = vld [vmem:[%s1 + $0xc] sm:$0xf]
  %v33 = vld [vmem:[%s2] sm:$0x1]
  %v35 = vperm.slane %v33, 0
  %v41 = vunpack.c.l.b16 %v29
  %v42 = vunpack.c.l.b16 %v30
  %v43 = vunpack.c.l.b16 %v31
  %v44 = vunpack.c.l.b16 %v32
  %v45 = vpack.c.b16 %v42, %v41
  %v46 = vpack.c.b16 %v44, %v43
  %vm49 = vcmask 261120
  %v51 = vsel %vm49, %v26, 0
  %v54 = vsel %vm49, %v27, 0
  %v57 = vsel %vm49, %v28, 0
  %59 = vmatpush.bf16.msra.mxu0 0
  %60 = vmatpush.bf16.msra.mxu0 0
  %61 = vmatpush.bf16.msra.mxu0 0
  %62 = vmatpush.bf16.msra.mxu0 0
  %63 = vmatpush.bf16.msra.mxu0 0
  %64 = vmatpush.bf16.msra.mxu0 0
  %65 = vmatpush.bf16.msra.mxu0 %v46
  %66 = vmatpush.bf16.msra.mxu0 %v45
  %67 = vmatmul.bf16.gmra.mxu0 %v51
  %v68 = vpop.f32.mrf.mxu0
  %v69 = vadd.f32 %v35, %v68
  %v70 = vpop.f32.mrf.mxu0
  %v71 = vadd.f32 %v35, %v70
  %72 = vmatmul.bf16.gmra.mxu0 %v54
  %v73 = vpop.f32.mrf.mxu0
  %v74 = vadd.f32 %v35, %v73
  %v75 = vpop.f32.mrf.mxu0
  %v76 = vadd.f32 %v35, %v75
  %77 = vmatmul.bf16.gmra.mxu0 %v57
  %v78 = vpop.f32.mrf.mxu0
  %v79 = vadd.f32 %v35, %v78
  %v80 = vpop.f32.mrf.mxu0
  %81 = vdwg.mxu0
  %v82 = vmax.f32 %v69, 0.0
  %v83 = vmax.f32 %v71, 0.0
  %v84 = vmax.f32 %v74, 0.0
  %v85 = vmax.f32 %v76, 0.0
  %v86 = vmax.f32 %v79, 0.0
  %v87 = vpack.c.bf16 %v83, %v82
  %v88 = vpack.c.bf16 %v85, %v84
  %v89 = vpack.c.bf16 %v86, %v86
  %v90 = vld [vmem:[%s3] sm:$0xf]
  %v91 = vld [vmem:[%s3 + $0x4] sm:$0xf]
  %v92 = vld [vmem:[%s3 + $0x8] sm:$0xf]
  %v93 = vld [vmem:[%s3 + $0xc] sm:$0xf]
  %v94 = vld [vmem:[%s3 + $0x10] sm:$0xf]
  %v95 = vld [vmem:[%s3 + $0x14] sm:$0xf]
  %v96 = vld [vmem:[%s3 + $0x18] sm:$0xf]
  %v97 = vld [vmem:[%s3 + $0x1c] sm:$0xf]
  %v98 = vld [vmem:[%s4] sm:$0x1]
  %v100 = vperm.slane %v98, 0
  %v110 = vunpack.c.l.b16 %v90
  %v111 = vunpack.c.l.b16 %v91
  %v112 = vunpack.c.l.b16 %v92
  %v113 = vunpack.c.l.b16 %v93
  %v114 = vunpack.c.l.b16 %v94
  %v115 = vunpack.c.l.b16 %v95
  %v116 = vunpack.c.l.b16 %v96
  %v117 = vunpack.c.l.b16 %v97
  %v118 = vpack.c.b16 %v111, %v110
  %v119 = vpack.c.b16 %v113, %v112
  %v120 = vpack.c.b16 %v115, %v114
  %v121 = vpack.c.b16 %v117, %v116
  %vm126 = vcmask 523264
  %v128 = vsel %vm126, %v87, 0
  %v131 = vsel %vm126, %v88, 0
  %v134 = vsel %vm126, %v89, 0
  %136 = vmatpush.bf16.msra.mxu0 0
  %137 = vmatpush.bf16.msra.mxu0 0
  %138 = vmatpush.bf16.msra.mxu0 0
  %139 = vmatpush.bf16.msra.mxu0 0
  %140 = vmatpush.bf16.msra.mxu0 %v121
  %141 = vmatpush.bf16.msra.mxu0 %v120
  %142 = vmatpush.bf16.msra.mxu0 %v119
  %143 = vmatpush.bf16.msra.mxu0 %v118
  %144 = vmatmul.bf16.gmra.mxu0 %v128
  %v145 = vpop.f32.mrf.mxu0
  %v146 = vadd.f32 %v100, %v145
  %v147 = vpop.f32.mrf.mxu0
  %v148 = vadd.f32 %v100, %v147
  %149 = vmatmul.bf16.gmra.mxu0 %v131
  %v150 = vpop.f32.mrf.mxu0
  %v151 = vadd.f32 %v100, %v150
  %v152 = vpop.f32.mrf.mxu0
  %v153 = vadd.f32 %v100, %v152
  %154 = vmatmul.bf16.gmra.mxu0 %v134
  %v155 = vpop.f32.mrf.mxu0
  %v156 = vadd.f32 %v100, %v155
  %v157 = vpop.f32.mrf.mxu0
  %158 = vdwg.mxu0
  %vm159 = vcmask 130048
  %160 = vst.msk [vmem:[%s5] sm:$0xff] %vm159, %v146
  %161 = vst.msk [vmem:[%s5 + $0x8] sm:$0xff] %vm159, %v148
  %162 = vst.msk [vmem:[%s5 + $0x10] sm:$0xff] %vm159, %v151
  %163 = vst.msk [vmem:[%s5 + $0x18] sm:$0xff] %vm159, %v153
  %164 = vst.msk [vmem:[%s5 + $0x20] sm:$0xff] %vm159, %v156
  // Predicated region
  $region22: #{tpu_custom_call.1} parent=0 // pred_check
    _
  $region23: #{tpu_custom_call.1} parent=0 // pred_check_branch
    %166 = sbr.rel (0) target = $region25
  $region24: #{tpu_custom_call.1} parent=0 // pred_region
    _
  $region25: #{tpu_custom_call.1} parent=0 // pred_fallthru
    _
  // Predicated region
  $region26: #{tpu_custom_call.1} parent=0 // pred_check
    _
  $region27: #{tpu_custom_call.1} parent=0 // pred_check_branch
    %168 = sbr.rel (0) target = $region29
  $region28: #{tpu_custom_call.1} parent=0 // pred_region
    _
  $region29: #{tpu_custom_call.1} parent=0 // pred_fallthru
    _

</llo_original>
